<compile_context>
chip_gen: v7x
topology: tpu7x:2x2x1
jax: 0.10.0
libtpu: 0.0.40
codegen_flags: <defaults>
</compile_context>

<pallas_src>
import functools

import jax
import jax.numpy as jnp
from jax import lax
from jax.experimental import pallas as pl
from jax.experimental.pallas import tpu as pltpu

N_TERMS = 30
A_COEF = 0.75

LANES = 128
STRIP_ROWS = 32          # 32x128 f32 strip = 4 vregs per live value
MAX_BLOCK_ROWS = 1024    # 1024x128 f32 = 512 KiB per block (in+out ~2 MiB dbl-buffered)
# Terms with weight 2^(1-n) below one f32 ULP of the accumulator are pure
# quantization noise (< 2.4e-7 total for n >= 24), so the series is truncated.
MAX_USEFUL_TERMS = 24


def _blancmange_kernel(x_ref, o_ref, *, n_terms, a, strip_rows):
    # x_ref / o_ref: (block_rows, 128) float32 VMEM tiles; block_rows % strip_rows == 0.
    n_strips = x_ref.shape[0] // strip_rows
    half_a = 0.5 * a

    def _process_strip(s):
        start = pl.multiple_of(s * strip_rows, strip_rows)
        x = x_ref[pl.ds(start, strip_rows), :]
        # Loop invariants, hoisted. The "/2" of the mod-2 sawtooth is folded
        # into ax_half and the 2^(1-n) weight below.
        ax_half = half_a * jnp.sqrt(jnp.abs(x))
        h = x * 0.5        # x   * 2^(n-1); doubled each term (exact)
        axf = a * x        # a*x * 2^n    ; doubled each term (exact)
        y = jnp.zeros_like(x)
        inv2 = 2.0         # 2^(1-n)      ; halved each term (exact)
        # Static unroll of the term chain: all values are strip-sized and stay
        # register-resident for the whole chain (no per-term VMEM round trips).
        for _ in range(n_terms):
            modulation = jnp.tanh(axf)        # EUP transcendental (free slot vs VPU)
            frac = h - jnp.floor(h)           # floor-mod(x*2^n, 2) / 2
            y = y + modulation * (jnp.abs(frac - ax_half) * inv2)
            h = h * 2.0
            axf = axf * 2.0
            inv2 = inv2 * 0.5
        o_ref[pl.ds(start, strip_rows), :] = y * 0.5

    if n_strips == 1:
        _process_strip(0)
    else:
        def _body(s, carry):
            _process_strip(s)
            return carry
        lax.fori_loop(0, n_strips, _body, 0)


def _choose_block_rows(rows):
    """rows is a multiple of STRIP_ROWS. Pick a block size (multiple of
    STRIP_ROWS, <= MAX_BLOCK_ROWS) aiming for an even grid length so v7x's two
    TensorCores both get work, while keeping blocks large."""
    total_strips = rows // STRIP_ROWS
    if total_strips <= 1:
        return rows
    max_strips = MAX_BLOCK_ROWS // STRIP_ROWS
    n_blocks = max(2, -(-total_strips // max_strips))
    if n_blocks % 2:
        n_blocks += 1
    strips_per_block = -(-total_strips // n_blocks)
    return strips_per_block * STRIP_ROWS


@functools.partial(jax.jit, static_argnames=("n_terms", "a"))
def modulated_blancmange(x, *, n_terms=N_TERMS, a=A_COEF):
    """ModulatedBlancmange forward. x: float array of any shape (e.g. NCHW)."""
    orig_shape, orig_dtype = x.shape, x.dtype
    total = x.size
    if total == 0:
        return x

    n_eff = min(int(n_terms), MAX_USEFUL_TERMS)

    flat = x.reshape(-1).astype(jnp.float32)
    # Pad to a whole number of (32-row x 128-lane) strips (<= 16 KiB waste;
    # zero padding is safe: sqrt(0)/tanh(0) are finite and padded rows are sliced off).
    chunk = LANES * STRIP_ROWS
    padded = pl.cdiv(total, chunk) * chunk
    if padded != total:
        flat = jnp.pad(flat, (0, padded - total))
    rows = padded // LANES
    x2d = flat.reshape(rows, LANES)

    block_rows = _choose_block_rows(rows)
    grid = (pl.cdiv(rows, block_rows),)

    kernel = functools.partial(
        _blancmange_kernel, n_terms=n_eff, a=float(a), strip_rows=STRIP_ROWS)

    out2d = pl.pallas_call(
        kernel,
        out_shape=jax.ShapeDtypeStruct((rows, LANES), jnp.float32),
        grid=grid,
        in_specs=[pl.BlockSpec((block_rows, LANES), lambda i: (i, 0))],
        out_specs=pl.BlockSpec((block_rows, LANES), lambda i: (i, 0)),
        compiler_params=pltpu.CompilerParams(
            dimension_semantics=("parallel",)),
    )(x2d)

    out = out2d.reshape(-1)[:total].reshape(orig_shape)
    return out.astype(orig_dtype)


def _reference(x, n_terms=N_TERMS, a=A_COEF):
    """Plain-JAX reference mirroring the PyTorch forward exactly (full 30 terms)."""
    y = jnp.zeros_like(x)
    for n in range(n_terms):
        factor = float(2 ** n)
        modulation = jnp.tanh(a * factor * x)
        ax = a * jnp.sqrt(jnp.abs(x))
        y = y + modulation * jnp.abs(jnp.mod(x * factor, 2.0) - ax) / factor
    return y / 2.0


if __name__ == "__main__":
    key = jax.random.PRNGKey(0)
    # NCHW input consistent with a conv-style visualization module.
    x = jax.random.normal(key, (2, 4, 16, 16), dtype=jnp.float32)

    out = jax.block_until_ready(modulated_blancmange(x))
    ref = _reference(x)

    assert out.shape == x.shape and out.dtype == x.dtype
    assert jnp.allclose(out, ref, atol=1e-5, rtol=1e-5), "mismatch vs reference"
    print("KERNEL_OK")
</pallas_src>

<mosaic_0001>
module attributes {stable_mosaic.version = 11 : i64} {
  func.func @_blancmange_kernel(%arg0: i32, %arg1: memref<32x128xf32, #tpu.memory_space<vmem>>, %arg2: memref<32x128xf32, #tpu.memory_space<vmem>>) attributes {dimension_semantics = [#tpu.dimension_semantics<parallel>], iteration_bounds = array<i64: 1>, scalar_prefetch = 0 : i64, scratch_operands = 0 : i64, tpu.core_type = #tpu.core_type<tc>, window_params = [{transform_indices = @transform_0, window_bounds = array<i64: 32, 128>}, {transform_indices = @transform_1, window_bounds = array<i64: 32, 128>}]} {
    %c0_i32 = arith.constant 0 : i32
    %0 = tpu.assume_multiple %c0_i32, 32 : i32
    %1 = arith.index_cast %0 : i32 to index
    %c0 = arith.constant 0 : index
    %2 = vector.load %arg1[%1, %c0] : memref<32x128xf32, #tpu.memory_space<vmem>>, vector<32x128xf32>
    %3 = math.absf %2 : vector<32x128xf32>
    %4 = math.sqrt %3 : vector<32x128xf32>
    %cst = arith.constant 3.750000e-01 : f32
    %5 = vector.broadcast %cst : f32 to vector<32x128xf32>
    %6 = arith.mulf %5, %4 : vector<32x128xf32>
    %cst_0 = arith.constant 5.000000e-01 : f32
    %7 = vector.broadcast %cst_0 : f32 to vector<32x128xf32>
    %8 = arith.mulf %2, %7 : vector<32x128xf32>
    %cst_1 = arith.constant 7.500000e-01 : f32
    %9 = vector.broadcast %cst_1 : f32 to vector<32x128xf32>
    %10 = arith.mulf %9, %2 : vector<32x128xf32>
    %cst_2 = arith.constant 0.000000e+00 : f32
    %11 = vector.broadcast %cst_2 : f32 to vector<32x128xf32>
    %12 = math.tanh %10 : vector<32x128xf32>
    %13 = math.floor %8 : vector<32x128xf32>
    %14 = arith.subf %8, %13 : vector<32x128xf32>
    %15 = arith.subf %14, %6 : vector<32x128xf32>
    %16 = math.absf %15 : vector<32x128xf32>
    %cst_3 = arith.constant 2.000000e+00 : f32
    %17 = vector.broadcast %cst_3 : f32 to vector<32x128xf32>
    %18 = arith.mulf %16, %17 : vector<32x128xf32>
    %19 = arith.mulf %12, %18 : vector<32x128xf32>
    %20 = arith.addf %11, %19 : vector<32x128xf32>
    %cst_4 = arith.constant 2.000000e+00 : f32
    %21 = vector.broadcast %cst_4 : f32 to vector<32x128xf32>
    %22 = arith.mulf %8, %21 : vector<32x128xf32>
    %cst_5 = arith.constant 2.000000e+00 : f32
    %23 = vector.broadcast %cst_5 : f32 to vector<32x128xf32>
    %24 = arith.mulf %10, %23 : vector<32x128xf32>
    %25 = math.tanh %24 : vector<32x128xf32>
    %26 = math.floor %22 : vector<32x128xf32>
    %27 = arith.subf %22, %26 : vector<32x128xf32>
    %28 = arith.subf %27, %6 : vector<32x128xf32>
    %29 = math.absf %28 : vector<32x128xf32>
    %cst_6 = arith.constant 1.000000e+00 : f32
    %30 = vector.broadcast %cst_6 : f32 to vector<32x128xf32>
    %31 = arith.mulf %29, %30 : vector<32x128xf32>
    %32 = arith.mulf %25, %31 : vector<32x128xf32>
    %33 = arith.addf %20, %32 : vector<32x128xf32>
    %cst_7 = arith.constant 2.000000e+00 : f32
    %34 = vector.broadcast %cst_7 : f32 to vector<32x128xf32>
    %35 = arith.mulf %22, %34 : vector<32x128xf32>
    %cst_8 = arith.constant 2.000000e+00 : f32
    %36 = vector.broadcast %cst_8 : f32 to vector<32x128xf32>
    %37 = arith.mulf %24, %36 : vector<32x128xf32>
    %38 = math.tanh %37 : vector<32x128xf32>
    %39 = math.floor %35 : vector<32x128xf32>
    %40 = arith.subf %35, %39 : vector<32x128xf32>
    %41 = arith.subf %40, %6 : vector<32x128xf32>
    %42 = math.absf %41 : vector<32x128xf32>
    %cst_9 = arith.constant 5.000000e-01 : f32
    %43 = vector.broadcast %cst_9 : f32 to vector<32x128xf32>
    %44 = arith.mulf %42, %43 : vector<32x128xf32>
    %45 = arith.mulf %38, %44 : vector<32x128xf32>
    %46 = arith.addf %33, %45 : vector<32x128xf32>
    %cst_10 = arith.constant 2.000000e+00 : f32
    %47 = vector.broadcast %cst_10 : f32 to vector<32x128xf32>
    %48 = arith.mulf %35, %47 : vector<32x128xf32>
    %cst_11 = arith.constant 2.000000e+00 : f32
    %49 = vector.broadcast %cst_11 : f32 to vector<32x128xf32>
    %50 = arith.mulf %37, %49 : vector<32x128xf32>
    %51 = math.tanh %50 : vector<32x128xf32>
    %52 = math.floor %48 : vector<32x128xf32>
    %53 = arith.subf %48, %52 : vector<32x128xf32>
    %54 = arith.subf %53, %6 : vector<32x128xf32>
    %55 = math.absf %54 : vector<32x128xf32>
    %cst_12 = arith.constant 2.500000e-01 : f32
    %56 = vector.broadcast %cst_12 : f32 to vector<32x128xf32>
    %57 = arith.mulf %55, %56 : vector<32x128xf32>
    %58 = arith.mulf %51, %57 : vector<32x128xf32>
    %59 = arith.addf %46, %58 : vector<32x128xf32>
    %cst_13 = arith.constant 2.000000e+00 : f32
    %60 = vector.broadcast %cst_13 : f32 to vector<32x128xf32>
    %61 = arith.mulf %48, %60 : vector<32x128xf32>
    %cst_14 = arith.constant 2.000000e+00 : f32
    %62 = vector.broadcast %cst_14 : f32 to vector<32x128xf32>
    %63 = arith.mulf %50, %62 : vector<32x128xf32>
    %64 = math.tanh %63 : vector<32x128xf32>
    %65 = math.floor %61 : vector<32x128xf32>
    %66 = arith.subf %61, %65 : vector<32x128xf32>
    %67 = arith.subf %66, %6 : vector<32x128xf32>
    %68 = math.absf %67 : vector<32x128xf32>
    %cst_15 = arith.constant 1.250000e-01 : f32
    %69 = vector.broadcast %cst_15 : f32 to vector<32x128xf32>
    %70 = arith.mulf %68, %69 : vector<32x128xf32>
    %71 = arith.mulf %64, %70 : vector<32x128xf32>
    %72 = arith.addf %59, %71 : vector<32x128xf32>
    %cst_16 = arith.constant 2.000000e+00 : f32
    %73 = vector.broadcast %cst_16 : f32 to vector<32x128xf32>
    %74 = arith.mulf %61, %73 : vector<32x128xf32>
    %cst_17 = arith.constant 2.000000e+00 : f32
    %75 = vector.broadcast %cst_17 : f32 to vector<32x128xf32>
    %76 = arith.mulf %63, %75 : vector<32x128xf32>
    %77 = math.tanh %76 : vector<32x128xf32>
    %78 = math.floor %74 : vector<32x128xf32>
    %79 = arith.subf %74, %78 : vector<32x128xf32>
    %80 = arith.subf %79, %6 : vector<32x128xf32>
    %81 = math.absf %80 : vector<32x128xf32>
    %cst_18 = arith.constant 6.250000e-02 : f32
    %82 = vector.broadcast %cst_18 : f32 to vector<32x128xf32>
    %83 = arith.mulf %81, %82 : vector<32x128xf32>
    %84 = arith.mulf %77, %83 : vector<32x128xf32>
    %85 = arith.addf %72, %84 : vector<32x128xf32>
    %cst_19 = arith.constant 2.000000e+00 : f32
    %86 = vector.broadcast %cst_19 : f32 to vector<32x128xf32>
    %87 = arith.mulf %74, %86 : vector<32x128xf32>
    %cst_20 = arith.constant 2.000000e+00 : f32
    %88 = vector.broadcast %cst_20 : f32 to vector<32x128xf32>
    %89 = arith.mulf %76, %88 : vector<32x128xf32>
    %90 = math.tanh %89 : vector<32x128xf32>
    %91 = math.floor %87 : vector<32x128xf32>
    %92 = arith.subf %87, %91 : vector<32x128xf32>
    %93 = arith.subf %92, %6 : vector<32x128xf32>
    %94 = math.absf %93 : vector<32x128xf32>
    %cst_21 = arith.constant 3.125000e-02 : f32
    %95 = vector.broadcast %cst_21 : f32 to vector<32x128xf32>
    %96 = arith.mulf %94, %95 : vector<32x128xf32>
    %97 = arith.mulf %90, %96 : vector<32x128xf32>
    %98 = arith.addf %85, %97 : vector<32x128xf32>
    %cst_22 = arith.constant 2.000000e+00 : f32
    %99 = vector.broadcast %cst_22 : f32 to vector<32x128xf32>
    %100 = arith.mulf %87, %99 : vector<32x128xf32>
    %cst_23 = arith.constant 2.000000e+00 : f32
    %101 = vector.broadcast %cst_23 : f32 to vector<32x128xf32>
    %102 = arith.mulf %89, %101 : vector<32x128xf32>
    %103 = math.tanh %102 : vector<32x128xf32>
    %104 = math.floor %100 : vector<32x128xf32>
    %105 = arith.subf %100, %104 : vector<32x128xf32>
    %106 = arith.subf %105, %6 : vector<32x128xf32>
    %107 = math.absf %106 : vector<32x128xf32>
    %cst_24 = arith.constant 1.562500e-02 : f32
    %108 = vector.broadcast %cst_24 : f32 to vector<32x128xf32>
    %109 = arith.mulf %107, %108 : vector<32x128xf32>
    %110 = arith.mulf %103, %109 : vector<32x128xf32>
    %111 = arith.addf %98, %110 : vector<32x128xf32>
    %cst_25 = arith.constant 2.000000e+00 : f32
    %112 = vector.broadcast %cst_25 : f32 to vector<32x128xf32>
    %113 = arith.mulf %100, %112 : vector<32x128xf32>
    %cst_26 = arith.constant 2.000000e+00 : f32
    %114 = vector.broadcast %cst_26 : f32 to vector<32x128xf32>
    %115 = arith.mulf %102, %114 : vector<32x128xf32>
    %116 = math.tanh %115 : vector<32x128xf32>
    %117 = math.floor %113 : vector<32x128xf32>
    %118 = arith.subf %113, %117 : vector<32x128xf32>
    %119 = arith.subf %118, %6 : vector<32x128xf32>
    %120 = math.absf %119 : vector<32x128xf32>
    %cst_27 = arith.constant 7.812500e-03 : f32
    %121 = vector.broadcast %cst_27 : f32 to vector<32x128xf32>
    %122 = arith.mulf %120, %121 : vector<32x128xf32>
    %123 = arith.mulf %116, %122 : vector<32x128xf32>
    %124 = arith.addf %111, %123 : vector<32x128xf32>
    %cst_28 = arith.constant 2.000000e+00 : f32
    %125 = vector.broadcast %cst_28 : f32 to vector<32x128xf32>
    %126 = arith.mulf %113, %125 : vector<32x128xf32>
    %cst_29 = arith.constant 2.000000e+00 : f32
    %127 = vector.broadcast %cst_29 : f32 to vector<32x128xf32>
    %128 = arith.mulf %115, %127 : vector<32x128xf32>
    %129 = math.tanh %128 : vector<32x128xf32>
    %130 = math.floor %126 : vector<32x128xf32>
    %131 = arith.subf %126, %130 : vector<32x128xf32>
    %132 = arith.subf %131, %6 : vector<32x128xf32>
    %133 = math.absf %132 : vector<32x128xf32>
    %cst_30 = arith.constant 3.906250e-03 : f32
    %134 = vector.broadcast %cst_30 : f32 to vector<32x128xf32>
    %135 = arith.mulf %133, %134 : vector<32x128xf32>
    %136 = arith.mulf %129, %135 : vector<32x128xf32>
    %137 = arith.addf %124, %136 : vector<32x128xf32>
    %cst_31 = arith.constant 2.000000e+00 : f32
    %138 = vector.broadcast %cst_31 : f32 to vector<32x128xf32>
    %139 = arith.mulf %126, %138 : vector<32x128xf32>
    %cst_32 = arith.constant 2.000000e+00 : f32
    %140 = vector.broadcast %cst_32 : f32 to vector<32x128xf32>
    %141 = arith.mulf %128, %140 : vector<32x128xf32>
    %142 = math.tanh %141 : vector<32x128xf32>
    %143 = math.floor %139 : vector<32x128xf32>
    %144 = arith.subf %139, %143 : vector<32x128xf32>
    %145 = arith.subf %144, %6 : vector<32x128xf32>
    %146 = math.absf %145 : vector<32x128xf32>
    %cst_33 = arith.constant 0.001953125 : f32
    %147 = vector.broadcast %cst_33 : f32 to vector<32x128xf32>
    %148 = arith.mulf %146, %147 : vector<32x128xf32>
    %149 = arith.mulf %142, %148 : vector<32x128xf32>
    %150 = arith.addf %137, %149 : vector<32x128xf32>
    %cst_34 = arith.constant 2.000000e+00 : f32
    %151 = vector.broadcast %cst_34 : f32 to vector<32x128xf32>
    %152 = arith.mulf %139, %151 : vector<32x128xf32>
    %cst_35 = arith.constant 2.000000e+00 : f32
    %153 = vector.broadcast %cst_35 : f32 to vector<32x128xf32>
    %154 = arith.mulf %141, %153 : vector<32x128xf32>
    %155 = math.tanh %154 : vector<32x128xf32>
    %156 = math.floor %152 : vector<32x128xf32>
    %157 = arith.subf %152, %156 : vector<32x128xf32>
    %158 = arith.subf %157, %6 : vector<32x128xf32>
    %159 = math.absf %158 : vector<32x128xf32>
    %cst_36 = arith.constant 9.765625E-4 : f32
    %160 = vector.broadcast %cst_36 : f32 to vector<32x128xf32>
    %161 = arith.mulf %159, %160 : vector<32x128xf32>
    %162 = arith.mulf %155, %161 : vector<32x128xf32>
    %163 = arith.addf %150, %162 : vector<32x128xf32>
    %cst_37 = arith.constant 2.000000e+00 : f32
    %164 = vector.broadcast %cst_37 : f32 to vector<32x128xf32>
    %165 = arith.mulf %152, %164 : vector<32x128xf32>
    %cst_38 = arith.constant 2.000000e+00 : f32
    %166 = vector.broadcast %cst_38 : f32 to vector<32x128xf32>
    %167 = arith.mulf %154, %166 : vector<32x128xf32>
    %168 = math.tanh %167 : vector<32x128xf32>
    %169 = math.floor %165 : vector<32x128xf32>
    %170 = arith.subf %165, %169 : vector<32x128xf32>
    %171 = arith.subf %170, %6 : vector<32x128xf32>
    %172 = math.absf %171 : vector<32x128xf32>
    %cst_39 = arith.constant 4.8828125E-4 : f32
    %173 = vector.broadcast %cst_39 : f32 to vector<32x128xf32>
    %174 = arith.mulf %172, %173 : vector<32x128xf32>
    %175 = arith.mulf %168, %174 : vector<32x128xf32>
    %176 = arith.addf %163, %175 : vector<32x128xf32>
    %cst_40 = arith.constant 2.000000e+00 : f32
    %177 = vector.broadcast %cst_40 : f32 to vector<32x128xf32>
    %178 = arith.mulf %165, %177 : vector<32x128xf32>
    %cst_41 = arith.constant 2.000000e+00 : f32
    %179 = vector.broadcast %cst_41 : f32 to vector<32x128xf32>
    %180 = arith.mulf %167, %179 : vector<32x128xf32>
    %181 = math.tanh %180 : vector<32x128xf32>
    %182 = math.floor %178 : vector<32x128xf32>
    %183 = arith.subf %178, %182 : vector<32x128xf32>
    %184 = arith.subf %183, %6 : vector<32x128xf32>
    %185 = math.absf %184 : vector<32x128xf32>
    %cst_42 = arith.constant 2.44140625E-4 : f32
    %186 = vector.broadcast %cst_42 : f32 to vector<32x128xf32>
    %187 = arith.mulf %185, %186 : vector<32x128xf32>
    %188 = arith.mulf %181, %187 : vector<32x128xf32>
    %189 = arith.addf %176, %188 : vector<32x128xf32>
    %cst_43 = arith.constant 2.000000e+00 : f32
    %190 = vector.broadcast %cst_43 : f32 to vector<32x128xf32>
    %191 = arith.mulf %178, %190 : vector<32x128xf32>
    %cst_44 = arith.constant 2.000000e+00 : f32
    %192 = vector.broadcast %cst_44 : f32 to vector<32x128xf32>
    %193 = arith.mulf %180, %192 : vector<32x128xf32>
    %194 = math.tanh %193 : vector<32x128xf32>
    %195 = math.floor %191 : vector<32x128xf32>
    %196 = arith.subf %191, %195 : vector<32x128xf32>
    %197 = arith.subf %196, %6 : vector<32x128xf32>
    %198 = math.absf %197 : vector<32x128xf32>
    %cst_45 = arith.constant 1.22070313E-4 : f32
    %199 = vector.broadcast %cst_45 : f32 to vector<32x128xf32>
    %200 = arith.mulf %198, %199 : vector<32x128xf32>
    %201 = arith.mulf %194, %200 : vector<32x128xf32>
    %202 = arith.addf %189, %201 : vector<32x128xf32>
    %cst_46 = arith.constant 2.000000e+00 : f32
    %203 = vector.broadcast %cst_46 : f32 to vector<32x128xf32>
    %204 = arith.mulf %191, %203 : vector<32x128xf32>
    %cst_47 = arith.constant 2.000000e+00 : f32
    %205 = vector.broadcast %cst_47 : f32 to vector<32x128xf32>
    %206 = arith.mulf %193, %205 : vector<32x128xf32>
    %207 = math.tanh %206 : vector<32x128xf32>
    %208 = math.floor %204 : vector<32x128xf32>
    %209 = arith.subf %204, %208 : vector<32x128xf32>
    %210 = arith.subf %209, %6 : vector<32x128xf32>
    %211 = math.absf %210 : vector<32x128xf32>
    %cst_48 = arith.constant 6.10351563E-5 : f32
    %212 = vector.broadcast %cst_48 : f32 to vector<32x128xf32>
    %213 = arith.mulf %211, %212 : vector<32x128xf32>
    %214 = arith.mulf %207, %213 : vector<32x128xf32>
    %215 = arith.addf %202, %214 : vector<32x128xf32>
    %cst_49 = arith.constant 2.000000e+00 : f32
    %216 = vector.broadcast %cst_49 : f32 to vector<32x128xf32>
    %217 = arith.mulf %204, %216 : vector<32x128xf32>
    %cst_50 = arith.constant 2.000000e+00 : f32
    %218 = vector.broadcast %cst_50 : f32 to vector<32x128xf32>
    %219 = arith.mulf %206, %218 : vector<32x128xf32>
    %220 = math.tanh %219 : vector<32x128xf32>
    %221 = math.floor %217 : vector<32x128xf32>
    %222 = arith.subf %217, %221 : vector<32x128xf32>
    %223 = arith.subf %222, %6 : vector<32x128xf32>
    %224 = math.absf %223 : vector<32x128xf32>
    %cst_51 = arith.constant 3.05175781E-5 : f32
    %225 = vector.broadcast %cst_51 : f32 to vector<32x128xf32>
    %226 = arith.mulf %224, %225 : vector<32x128xf32>
    %227 = arith.mulf %220, %226 : vector<32x128xf32>
    %228 = arith.addf %215, %227 : vector<32x128xf32>
    %cst_52 = arith.constant 2.000000e+00 : f32
    %229 = vector.broadcast %cst_52 : f32 to vector<32x128xf32>
    %230 = arith.mulf %217, %229 : vector<32x128xf32>
    %cst_53 = arith.constant 2.000000e+00 : f32
    %231 = vector.broadcast %cst_53 : f32 to vector<32x128xf32>
    %232 = arith.mulf %219, %231 : vector<32x128xf32>
    %233 = math.tanh %232 : vector<32x128xf32>
    %234 = math.floor %230 : vector<32x128xf32>
    %235 = arith.subf %230, %234 : vector<32x128xf32>
    %236 = arith.subf %235, %6 : vector<32x128xf32>
    %237 = math.absf %236 : vector<32x128xf32>
    %cst_54 = arith.constant 1.52587891E-5 : f32
    %238 = vector.broadcast %cst_54 : f32 to vector<32x128xf32>
    %239 = arith.mulf %237, %238 : vector<32x128xf32>
    %240 = arith.mulf %233, %239 : vector<32x128xf32>
    %241 = arith.addf %228, %240 : vector<32x128xf32>
    %cst_55 = arith.constant 2.000000e+00 : f32
    %242 = vector.broadcast %cst_55 : f32 to vector<32x128xf32>
    %243 = arith.mulf %230, %242 : vector<32x128xf32>
    %cst_56 = arith.constant 2.000000e+00 : f32
    %244 = vector.broadcast %cst_56 : f32 to vector<32x128xf32>
    %245 = arith.mulf %232, %244 : vector<32x128xf32>
    %246 = math.tanh %245 : vector<32x128xf32>
    %247 = math.floor %243 : vector<32x128xf32>
    %248 = arith.subf %243, %247 : vector<32x128xf32>
    %249 = arith.subf %248, %6 : vector<32x128xf32>
    %250 = math.absf %249 : vector<32x128xf32>
    %cst_57 = arith.constant 7.62939453E-6 : f32
    %251 = vector.broadcast %cst_57 : f32 to vector<32x128xf32>
    %252 = arith.mulf %250, %251 : vector<32x128xf32>
    %253 = arith.mulf %246, %252 : vector<32x128xf32>
    %254 = arith.addf %241, %253 : vector<32x128xf32>
    %cst_58 = arith.constant 2.000000e+00 : f32
    %255 = vector.broadcast %cst_58 : f32 to vector<32x128xf32>
    %256 = arith.mulf %243, %255 : vector<32x128xf32>
    %cst_59 = arith.constant 2.000000e+00 : f32
    %257 = vector.broadcast %cst_59 : f32 to vector<32x128xf32>
    %258 = arith.mulf %245, %257 : vector<32x128xf32>
    %259 = math.tanh %258 : vector<32x128xf32>
    %260 = math.floor %256 : vector<32x128xf32>
    %261 = arith.subf %256, %260 : vector<32x128xf32>
    %262 = arith.subf %261, %6 : vector<32x128xf32>
    %263 = math.absf %262 : vector<32x128xf32>
    %cst_60 = arith.constant 3.81469727E-6 : f32
    %264 = vector.broadcast %cst_60 : f32 to vector<32x128xf32>
    %265 = arith.mulf %263, %264 : vector<32x128xf32>
    %266 = arith.mulf %259, %265 : vector<32x128xf32>
    %267 = arith.addf %254, %266 : vector<32x128xf32>
    %cst_61 = arith.constant 2.000000e+00 : f32
    %268 = vector.broadcast %cst_61 : f32 to vector<32x128xf32>
    %269 = arith.mulf %256, %268 : vector<32x128xf32>
    %cst_62 = arith.constant 2.000000e+00 : f32
    %270 = vector.broadcast %cst_62 : f32 to vector<32x128xf32>
    %271 = arith.mulf %258, %270 : vector<32x128xf32>
    %272 = math.tanh %271 : vector<32x128xf32>
    %273 = math.floor %269 : vector<32x128xf32>
    %274 = arith.subf %269, %273 : vector<32x128xf32>
    %275 = arith.subf %274, %6 : vector<32x128xf32>
    %276 = math.absf %275 : vector<32x128xf32>
    %cst_63 = arith.constant 1.90734863E-6 : f32
    %277 = vector.broadcast %cst_63 : f32 to vector<32x128xf32>
    %278 = arith.mulf %276, %277 : vector<32x128xf32>
    %279 = arith.mulf %272, %278 : vector<32x128xf32>
    %280 = arith.addf %267, %279 : vector<32x128xf32>
    %cst_64 = arith.constant 2.000000e+00 : f32
    %281 = vector.broadcast %cst_64 : f32 to vector<32x128xf32>
    %282 = arith.mulf %269, %281 : vector<32x128xf32>
    %cst_65 = arith.constant 2.000000e+00 : f32
    %283 = vector.broadcast %cst_65 : f32 to vector<32x128xf32>
    %284 = arith.mulf %271, %283 : vector<32x128xf32>
    %285 = math.tanh %284 : vector<32x128xf32>
    %286 = math.floor %282 : vector<32x128xf32>
    %287 = arith.subf %282, %286 : vector<32x128xf32>
    %288 = arith.subf %287, %6 : vector<32x128xf32>
    %289 = math.absf %288 : vector<32x128xf32>
    %cst_66 = arith.constant 9.53674316E-7 : f32
    %290 = vector.broadcast %cst_66 : f32 to vector<32x128xf32>
    %291 = arith.mulf %289, %290 : vector<32x128xf32>
    %292 = arith.mulf %285, %291 : vector<32x128xf32>
    %293 = arith.addf %280, %292 : vector<32x128xf32>
    %cst_67 = arith.constant 2.000000e+00 : f32
    %294 = vector.broadcast %cst_67 : f32 to vector<32x128xf32>
    %295 = arith.mulf %282, %294 : vector<32x128xf32>
    %cst_68 = arith.constant 2.000000e+00 : f32
    %296 = vector.broadcast %cst_68 : f32 to vector<32x128xf32>
    %297 = arith.mulf %284, %296 : vector<32x128xf32>
    %298 = math.tanh %297 : vector<32x128xf32>
    %299 = math.floor %295 : vector<32x128xf32>
    %300 = arith.subf %295, %299 : vector<32x128xf32>
    %301 = arith.subf %300, %6 : vector<32x128xf32>
    %302 = math.absf %301 : vector<32x128xf32>
    %cst_69 = arith.constant 4.76837158E-7 : f32
    %303 = vector.broadcast %cst_69 : f32 to vector<32x128xf32>
    %304 = arith.mulf %302, %303 : vector<32x128xf32>
    %305 = arith.mulf %298, %304 : vector<32x128xf32>
    %306 = arith.addf %293, %305 : vector<32x128xf32>
    %cst_70 = arith.constant 2.000000e+00 : f32
    %307 = vector.broadcast %cst_70 : f32 to vector<32x128xf32>
    %308 = arith.mulf %295, %307 : vector<32x128xf32>
    %cst_71 = arith.constant 2.000000e+00 : f32
    %309 = vector.broadcast %cst_71 : f32 to vector<32x128xf32>
    %310 = arith.mulf %297, %309 : vector<32x128xf32>
    %311 = math.tanh %310 : vector<32x128xf32>
    %312 = math.floor %308 : vector<32x128xf32>
    %313 = arith.subf %308, %312 : vector<32x128xf32>
    %314 = arith.subf %313, %6 : vector<32x128xf32>
    %315 = math.absf %314 : vector<32x128xf32>
    %cst_72 = arith.constant 2.38418579E-7 : f32
    %316 = vector.broadcast %cst_72 : f32 to vector<32x128xf32>
    %317 = arith.mulf %315, %316 : vector<32x128xf32>
    %318 = arith.mulf %311, %317 : vector<32x128xf32>
    %319 = arith.addf %306, %318 : vector<32x128xf32>
    %cst_73 = arith.constant 5.000000e-01 : f32
    %320 = vector.broadcast %cst_73 : f32 to vector<32x128xf32>
    %321 = arith.mulf %319, %320 : vector<32x128xf32>
    %322 = arith.index_cast %0 : i32 to index
    %c0_74 = arith.constant 0 : index
    %323 = vector.load %arg2[%322, %c0_74] : memref<32x128xf32, #tpu.memory_space<vmem>>, vector<32x128xf32>
    tpu.vector_store %arg2[%322, %c0_74], %321 {strides = array<i32>} : memref<32x128xf32, #tpu.memory_space<vmem>>, vector<32x128xf32>,
    return
  }
  func.func @transform_0(%arg0: i32) -> (i32, i32) {
    %c0_i32 = arith.constant 0 : i32
    %c0_i32_0 = arith.constant 0 : i32
    return %arg0, %c0_i32 : i32, i32
  }
  func.func @transform_1(%arg0: i32) -> (i32, i32) {
    %c0_i32 = arith.constant 0 : i32
    %c0_i32_0 = arith.constant 0 : i32
    return %arg0, %c0_i32 : i32, i32
  }
}

</mosaic_0001>

<llo_original>
// kernel: modulated_blancmange.1
$region0: #{modulated_blancmange.1}
  #allocation0 [shape = 'u32[]', space=smem, size = 0x4, offset = 0x4, fixed_abs, tag = 'smem constant byte address 0x4 - core index']
  #allocation1 [shape = 'u32[144,128]{1,0:T(1,128)}', space=vmem, size = 0x12000, scoped, tag = 'internal scratch']
  %s0 = inlined_call_operand.vmem [shape: f32[32,128], index: 0, kind: input, shape index: {}]
  %s1 = inlined_call_operand.vmem [shape: f32[32,128], index: 1, kind: output, shape index: {}]
  %s2 = sld [smem:[#allocation0]]
  $region14: #{modulated_blancmange.1} parent=0
    _
  %s4 = ssub.s32 1, %s2
  %s5 = scalar_select 0, %s4, %s2
  // Predicated region
  $region2: #{modulated_blancmange.1} parent=0 // pred_check
    _
  $region3: #{modulated_blancmange.1} parent=0 // pred_check_branch
    %7 = sbr.rel (0) target = $region5
  $region4: #{modulated_blancmange.1} parent=0 // pred_region
    _
  $region5: #{modulated_blancmange.1} parent=0 // pred_fallthru
    _
  %v8 = vld [vmem:[%s0] sm:$0xff]
  %v9 = vld [vmem:[%s0 + $0x8] sm:$0xff]
  %v10 = vld [vmem:[%s0 + $0x10] sm:$0xff]
  %v11 = vld [vmem:[%s0 + $0x18] sm:$0xff]
  %v12 = vand.u32 2147483647, %v8
  %v13 = vand.u32 2147483647, %v9
  %v14 = vand.u32 2147483647, %v10
  %v15 = vand.u32 2147483647, %v11
  %v16 = vrsqrt.pop %v12
  %v17 = vmul.f32 %v12, %v16
  %vm18 = vcmp.eq.f32.partialorder %v12, inf
  %v19 = vsel %vm18, %v12, %v17
  %vm20 = vcmp.eq.f32.partialorder %v12, 0.0
  %v21 = vand.u32 %v12, 2147483648
  %v22 = vsel %vm20, %v21, %v19
  %v23 = vrsqrt.pop %v13
  %v24 = vmul.f32 %v13, %v23
  %vm25 = vcmp.eq.f32.partialorder %v13, inf
  %v26 = vsel %vm25, %v13, %v24
  %vm27 = vcmp.eq.f32.partialorder %v13, 0.0
  %v28 = vand.u32 %v13, 2147483648
  %v29 = vsel %vm27, %v28, %v26
  %v30 = vrsqrt.pop %v14
  %v31 = vmul.f32 %v14, %v30
  %vm32 = vcmp.eq.f32.partialorder %v14, inf
  %v33 = vsel %vm32, %v14, %v31
  %vm34 = vcmp.eq.f32.partialorder %v14, 0.0
  %v35 = vand.u32 %v14, 2147483648
  %v36 = vsel %vm34, %v35, %v33
  %v37 = vrsqrt.pop %v15
  %v38 = vmul.f32 %v15, %v37
  %vm39 = vcmp.eq.f32.partialorder %v15, inf
  %v40 = vsel %vm39, %v15, %v38
  %vm41 = vcmp.eq.f32.partialorder %v15, 0.0
  %v42 = vand.u32 %v15, 2147483648
  %v43 = vsel %vm41, %v42, %v40
  %v44 = vmul.f32 %v22, 0.375
  %v45 = vmul.f32 %v29, 0.375
  %v46 = vmul.f32 %v36, 0.375
  %v47 = vmul.f32 %v43, 0.375
  %v48 = vmul.f32 %v8, 0.5
  %v49 = vmul.f32 %v9, 0.5
  %v50 = vmul.f32 %v10, 0.5
  %v51 = vmul.f32 %v11, 0.5
  %v52 = vmul.f32 %v8, 0.75
  %v53 = vmul.f32 %v9, 0.75
  %v54 = vmul.f32 %v10, 0.75
  %v55 = vmul.f32 %v11, 0.75
  %v56 = vtanh.pop %v52
  %v57 = vtanh.pop %v53
  %v58 = vtanh.pop %v54
  %v59 = vtanh.pop %v55
  %v60 = vfloor.f32 %v48
  %v61 = vfloor.f32 %v49
  %v62 = vfloor.f32 %v50
  %v63 = vfloor.f32 %v51
  %v64 = vsub.f32 %v48, %v60
  %v65 = vsub.f32 %v49, %v61
  %v66 = vsub.f32 %v50, %v62
  %v67 = vsub.f32 %v51, %v63
  %v68 = vsub.f32 %v64, %v44
  %v69 = vsub.f32 %v65, %v45
  %v70 = vsub.f32 %v66, %v46
  %v71 = vsub.f32 %v67, %v47
  %v72 = vand.u32 2147483647, %v68
  %v73 = vand.u32 2147483647, %v69
  %v74 = vand.u32 2147483647, %v70
  %v75 = vand.u32 2147483647, %v71
  %v76 = vmul.f32 %v72, 2.0
  %v77 = vmul.f32 %v73, 2.0
  %v78 = vmul.f32 %v74, 2.0
  %v79 = vmul.f32 %v75, 2.0
  %v80 = vmul.f32 %v56, %v76
  %v81 = vmul.f32 %v57, %v77
  %v82 = vmul.f32 %v58, %v78
  %v83 = vmul.f32 %v59, %v79
  %v84 = vadd.f32 %v80, 0.0
  %v85 = vadd.f32 %v81, 0.0
  %v86 = vadd.f32 %v82, 0.0
  %v87 = vadd.f32 %v83, 0.0
  %v88 = vmul.f32 %v48, 2.0
  %v89 = vmul.f32 %v49, 2.0
  %v90 = vmul.f32 %v50, 2.0
  %v91 = vmul.f32 %v51, 2.0
  %v92 = vmul.f32 %v52, 2.0
  %v93 = vmul.f32 %v53, 2.0
  %v94 = vmul.f32 %v54, 2.0
  %v95 = vmul.f32 %v55, 2.0
  %v96 = vtanh.pop %v92
  %v97 = vtanh.pop %v93
  %v98 = vtanh.pop %v94
  %v99 = vtanh.pop %v95
  %v100 = vfloor.f32 %v88
  %v101 = vfloor.f32 %v89
  %v102 = vfloor.f32 %v90
  %v103 = vfloor.f32 %v91
  %v104 = vsub.f32 %v88, %v100
  %v105 = vsub.f32 %v89, %v101
  %v106 = vsub.f32 %v90, %v102
  %v107 = vsub.f32 %v91, %v103
  %v108 = vsub.f32 %v104, %v44
  %v109 = vsub.f32 %v105, %v45
  %v110 = vsub.f32 %v106, %v46
  %v111 = vsub.f32 %v107, %v47
  %v112 = vand.u32 2147483647, %v108
  %v113 = vand.u32 2147483647, %v109
  %v114 = vand.u32 2147483647, %v110
  %v115 = vand.u32 2147483647, %v111
  %v116 = vmul.f32 %v96, %v112
  %v117 = vmul.f32 %v97, %v113
  %v118 = vmul.f32 %v98, %v114
  %v119 = vmul.f32 %v99, %v115
  %v120 = vadd.f32 %v84, %v116
  %v121 = vadd.f32 %v85, %v117
  %v122 = vadd.f32 %v86, %v118
  %v123 = vadd.f32 %v87, %v119
  %v124 = vmul.f32 %v88, 2.0
  %v125 = vmul.f32 %v89, 2.0
  %v126 = vmul.f32 %v90, 2.0
  %v127 = vmul.f32 %v91, 2.0
  %v128 = vmul.f32 %v92, 2.0
  %v129 = vmul.f32 %v93, 2.0
  %v130 = vmul.f32 %v94, 2.0
  %v131 = vmul.f32 %v95, 2.0
  %v132 = vtanh.pop %v128
  %v133 = vtanh.pop %v129
  %v134 = vtanh.pop %v130
  %v135 = vtanh.pop %v131
  %v136 = vfloor.f32 %v124
  %v137 = vfloor.f32 %v125
  %v138 = vfloor.f32 %v126
  %v139 = vfloor.f32 %v127
  %v140 = vsub.f32 %v124, %v136
  %v141 = vsub.f32 %v125, %v137
  %v142 = vsub.f32 %v126, %v138
  %v143 = vsub.f32 %v127, %v139
  %v144 = vsub.f32 %v140, %v44
  %v145 = vsub.f32 %v141, %v45
  %v146 = vsub.f32 %v142, %v46
  %v147 = vsub.f32 %v143, %v47
  %v148 = vand.u32 2147483647, %v144
  %v149 = vand.u32 2147483647, %v145
  %v150 = vand.u32 2147483647, %v146
  %v151 = vand.u32 2147483647, %v147
  %v152 = vmul.f32 %v148, 0.5
  %v153 = vmul.f32 %v149, 0.5
  %v154 = vmul.f32 %v150, 0.5
  %v155 = vmul.f32 %v151, 0.5
  %v156 = vmul.f32 %v132, %v152
  %v157 = vmul.f32 %v133, %v153
  %v158 = vmul.f32 %v134, %v154
  %v159 = vmul.f32 %v135, %v155
  %v160 = vadd.f32 %v120, %v156
  %v161 = vadd.f32 %v121, %v157
  %v162 = vadd.f32 %v122, %v158
  %v163 = vadd.f32 %v123, %v159
  %v164 = vmul.f32 %v124, 2.0
  %v165 = vmul.f32 %v125, 2.0
  %v166 = vmul.f32 %v126, 2.0
  %v167 = vmul.f32 %v127, 2.0
  %v168 = vmul.f32 %v128, 2.0
  %v169 = vmul.f32 %v129, 2.0
  %v170 = vmul.f32 %v130, 2.0
  %v171 = vmul.f32 %v131, 2.0
  %v172 = vtanh.pop %v168
  %v173 = vtanh.pop %v169
  %v174 = vtanh.pop %v170
  %v175 = vtanh.pop %v171
  %v176 = vfloor.f32 %v164
  %v177 = vfloor.f32 %v165
  %v178 = vfloor.f32 %v166
  %v179 = vfloor.f32 %v167
  %v180 = vsub.f32 %v164, %v176
  %v181 = vsub.f32 %v165, %v177
  %v182 = vsub.f32 %v166, %v178
  %v183 = vsub.f32 %v167, %v179
  %v184 = vsub.f32 %v180, %v44
  %v185 = vsub.f32 %v181, %v45
  %v186 = vsub.f32 %v182, %v46
  %v187 = vsub.f32 %v183, %v47
  %v188 = vand.u32 2147483647, %v184
  %v189 = vand.u32 2147483647, %v185
  %v190 = vand.u32 2147483647, %v186
  %v191 = vand.u32 2147483647, %v187
  %v192 = vmul.f32 %v188, 0.25
  %v193 = vmul.f32 %v189, 0.25
  %v194 = vmul.f32 %v190, 0.25
  %v195 = vmul.f32 %v191, 0.25
  %v196 = vmul.f32 %v172, %v192
  %v197 = vmul.f32 %v173, %v193
  %v198 = vmul.f32 %v174, %v194
  %v199 = vmul.f32 %v175, %v195
  %v200 = vadd.f32 %v160, %v196
  %v201 = vadd.f32 %v161, %v197
  %v202 = vadd.f32 %v162, %v198
  %v203 = vadd.f32 %v163, %v199
  %v204 = vmul.f32 %v164, 2.0
  %v205 = vmul.f32 %v165, 2.0
  %v206 = vmul.f32 %v166, 2.0
  %v207 = vmul.f32 %v167, 2.0
  %v208 = vmul.f32 %v168, 2.0
  %v209 = vmul.f32 %v169, 2.0
  %v210 = vmul.f32 %v170, 2.0
  %v211 = vmul.f32 %v171, 2.0
  %v212 = vtanh.pop %v208
  %v213 = vtanh.pop %v209
  %v214 = vtanh.pop %v210
  %v215 = vtanh.pop %v211
  %v216 = vfloor.f32 %v204
  %v217 = vfloor.f32 %v205
  %v218 = vfloor.f32 %v206
  %v219 = vfloor.f32 %v207
  %v220 = vsub.f32 %v204, %v216
  %v221 = vsub.f32 %v205, %v217
  %v222 = vsub.f32 %v206, %v218
  %v223 = vsub.f32 %v207, %v219
  %v224 = vsub.f32 %v220, %v44
  %v225 = vsub.f32 %v221, %v45
  %v226 = vsub.f32 %v222, %v46
  %v227 = vsub.f32 %v223, %v47
  %v228 = vand.u32 2147483647, %v224
  %v229 = vand.u32 2147483647, %v225
  %v230 = vand.u32 2147483647, %v226
  %v231 = vand.u32 2147483647, %v227
  %v232 = vmul.f32 %v228, 0.125
  %v233 = vmul.f32 %v229, 0.125
  %v234 = vmul.f32 %v230, 0.125
  %v235 = vmul.f32 %v231, 0.125
  %v236 = vmul.f32 %v212, %v232
  %v237 = vmul.f32 %v213, %v233
  %v238 = vmul.f32 %v214, %v234
  %v239 = vmul.f32 %v215, %v235
  %v240 = vadd.f32 %v200, %v236
  %v241 = vadd.f32 %v201, %v237
  %v242 = vadd.f32 %v202, %v238
  %v243 = vadd.f32 %v203, %v239
  %v244 = vmul.f32 %v204, 2.0
  %v245 = vmul.f32 %v205, 2.0
  %v246 = vmul.f32 %v206, 2.0
  %v247 = vmul.f32 %v207, 2.0
  %v248 = vmul.f32 %v208, 2.0
  %v249 = vmul.f32 %v209, 2.0
  %v250 = vmul.f32 %v210, 2.0
  %v251 = vmul.f32 %v211, 2.0
  %v252 = vtanh.pop %v248
  %v253 = vtanh.pop %v249
  %v254 = vtanh.pop %v250
  %v255 = vtanh.pop %v251
  %v256 = vfloor.f32 %v244
  %v257 = vfloor.f32 %v245
  %v258 = vfloor.f32 %v246
  %v259 = vfloor.f32 %v247
  %v260 = vsub.f32 %v244, %v256
  %v261 = vsub.f32 %v245, %v257
  %v262 = vsub.f32 %v246, %v258
  %v263 = vsub.f32 %v247, %v259
  %v264 = vsub.f32 %v260, %v44
  %v265 = vsub.f32 %v261, %v45
  %v266 = vsub.f32 %v262, %v46
  %v267 = vsub.f32 %v263, %v47
  %v268 = vand.u32 2147483647, %v264
  %v269 = vand.u32 2147483647, %v265
  %v270 = vand.u32 2147483647, %v266
  %v271 = vand.u32 2147483647, %v267
  %v272 = vmul.f32 %v268, 0.0625
  %v273 = vmul.f32 %v269, 0.0625
  %v274 = vmul.f32 %v270, 0.0625
  %v275 = vmul.f32 %v271, 0.0625
  %v276 = vmul.f32 %v252, %v272
  %v277 = vmul.f32 %v253, %v273
  %v278 = vmul.f32 %v254, %v274
  %v279 = vmul.f32 %v255, %v275
  %v280 = vadd.f32 %v240, %v276
  %v281 = vadd.f32 %v241, %v277
  %v282 = vadd.f32 %v242, %v278
  %v283 = vadd.f32 %v243, %v279
  %v284 = vmul.f32 %v244, 2.0
  %v285 = vmul.f32 %v245, 2.0
  %v286 = vmul.f32 %v246, 2.0
  %v287 = vmul.f32 %v247, 2.0
  %v288 = vmul.f32 %v248, 2.0
  %v289 = vmul.f32 %v249, 2.0
  %v290 = vmul.f32 %v250, 2.0
  %v291 = vmul.f32 %v251, 2.0
  %v292 = vtanh.pop %v288
  %v293 = vtanh.pop %v289
  %v294 = vtanh.pop %v290
  %v295 = vtanh.pop %v291
  %v296 = vfloor.f32 %v284
  %v297 = vfloor.f32 %v285
  %v298 = vfloor.f32 %v286
  %v299 = vfloor.f32 %v287
  %v300 = vsub.f32 %v284, %v296
  %v301 = vsub.f32 %v285, %v297
  %v302 = vsub.f32 %v286, %v298
  %v303 = vsub.f32 %v287, %v299
  %v304 = vsub.f32 %v300, %v44
  %v305 = vsub.f32 %v301, %v45
  %v306 = vsub.f32 %v302, %v46
  %v307 = vsub.f32 %v303, %v47
  %v308 = vand.u32 2147483647, %v304
  %v309 = vand.u32 2147483647, %v305
  %v310 = vand.u32 2147483647, %v306
  %v311 = vand.u32 2147483647, %v307
  %v312 = vmul.f32 %v308, 0.03125
  %v313 = vmul.f32 %v309, 0.03125
  %v314 = vmul.f32 %v310, 0.03125
  %v315 = vmul.f32 %v311, 0.03125
  %v316 = vmul.f32 %v292, %v312
  %v317 = vmul.f32 %v293, %v313
  %v318 = vmul.f32 %v294, %v314
  %v319 = vmul.f32 %v295, %v315
  %v320 = vadd.f32 %v280, %v316
  %v321 = vadd.f32 %v281, %v317
  %v322 = vadd.f32 %v282, %v318
  %v323 = vadd.f32 %v283, %v319
  %v324 = vmul.f32 %v284, 2.0
  %v325 = vmul.f32 %v285, 2.0
  %v326 = vmul.f32 %v286, 2.0
  %v327 = vmul.f32 %v287, 2.0
  %v328 = vmul.f32 %v288, 2.0
  %v329 = vmul.f32 %v289, 2.0
  %v330 = vmul.f32 %v290, 2.0
  %v331 = vmul.f32 %v291, 2.0
  %v332 = vtanh.pop %v328
  %v333 = vtanh.pop %v329
  %v334 = vtanh.pop %v330
  %v335 = vtanh.pop %v331
  %v336 = vfloor.f32 %v324
  %v337 = vfloor.f32 %v325
  %v338 = vfloor.f32 %v326
  %v339 = vfloor.f32 %v327
  %v340 = vsub.f32 %v324, %v336
  %v341 = vsub.f32 %v325, %v337
  %v342 = vsub.f32 %v326, %v338
  %v343 = vsub.f32 %v327, %v339
  %v344 = vsub.f32 %v340, %v44
  %v345 = vsub.f32 %v341, %v45
  %v346 = vsub.f32 %v342, %v46
  %v347 = vsub.f32 %v343, %v47
  %v348 = vand.u32 2147483647, %v344
  %v349 = vand.u32 2147483647, %v345
  %v350 = vand.u32 2147483647, %v346
  %v351 = vand.u32 2147483647, %v347
  %v352 = vmul.f32 %v348, 0.015625
  %v353 = vmul.f32 %v349, 0.015625
  %v354 = vmul.f32 %v350, 0.015625
  %v355 = vmul.f32 %v351, 0.015625
  %v356 = vmul.f32 %v332, %v352
  %v357 = vmul.f32 %v333, %v353
  %v358 = vmul.f32 %v334, %v354
  %v359 = vmul.f32 %v335, %v355
  %v360 = vadd.f32 %v320, %v356
  %v361 = vadd.f32 %v321, %v357
  %v362 = vadd.f32 %v322, %v358
  %v363 = vadd.f32 %v323, %v359
  %v364 = vmul.f32 %v324, 2.0
  %v365 = vmul.f32 %v325, 2.0
  %v366 = vmul.f32 %v326, 2.0
  %v367 = vmul.f32 %v327, 2.0
  %v368 = vmul.f32 %v328, 2.0
  %v369 = vmul.f32 %v329, 2.0
  %v370 = vmul.f32 %v330, 2.0
  %v371 = vmul.f32 %v331, 2.0
  %v372 = vtanh.pop %v368
  %v373 = vtanh.pop %v369
  %v374 = vtanh.pop %v370
  %v375 = vtanh.pop %v371
  %v376 = vfloor.f32 %v364
  %v377 = vfloor.f32 %v365
  %v378 = vfloor.f32 %v366
  %v379 = vfloor.f32 %v367
  %v380 = vsub.f32 %v364, %v376
  %v381 = vsub.f32 %v365, %v377
  %v382 = vsub.f32 %v366, %v378
  %v383 = vsub.f32 %v367, %v379
  %v384 = vsub.f32 %v380, %v44
  %v385 = vsub.f32 %v381, %v45
  %v386 = vsub.f32 %v382, %v46
  %v387 = vsub.f32 %v383, %v47
  %v388 = vand.u32 2147483647, %v384
  %v389 = vand.u32 2147483647, %v385
  %v390 = vand.u32 2147483647, %v386
  %v391 = vand.u32 2147483647, %v387
  %v392 = vmul.f32 %v388, 0.0078125
  %v393 = vmul.f32 %v389, 0.0078125
  %v394 = vmul.f32 %v390, 0.0078125
  %v395 = vmul.f32 %v391, 0.0078125
  %v396 = vmul.f32 %v372, %v392
  %v397 = vmul.f32 %v373, %v393
  %v398 = vmul.f32 %v374, %v394
  %v399 = vmul.f32 %v375, %v395
  %v400 = vadd.f32 %v360, %v396
  %v401 = vadd.f32 %v361, %v397
  %v402 = vadd.f32 %v362, %v398
  %v403 = vadd.f32 %v363, %v399
  %v404 = vmul.f32 %v364, 2.0
  %v405 = vmul.f32 %v365, 2.0
  %v406 = vmul.f32 %v366, 2.0
  %v407 = vmul.f32 %v367, 2.0
  %v408 = vmul.f32 %v368, 2.0
  %v409 = vmul.f32 %v369, 2.0
  %v410 = vmul.f32 %v370, 2.0
  %v411 = vmul.f32 %v371, 2.0
  %v412 = vtanh.pop %v408
  %v413 = vtanh.pop %v409
  %v414 = vtanh.pop %v410
  %v415 = vtanh.pop %v411
  %v416 = vfloor.f32 %v404
  %v417 = vfloor.f32 %v405
  %v418 = vfloor.f32 %v406
  %v419 = vfloor.f32 %v407
  %v420 = vsub.f32 %v404, %v416
  %v421 = vsub.f32 %v405, %v417
  %v422 = vsub.f32 %v406, %v418
  %v423 = vsub.f32 %v407, %v419
  %v424 = vsub.f32 %v420, %v44
  %v425 = vsub.f32 %v421, %v45
  %v426 = vsub.f32 %v422, %v46
  %v427 = vsub.f32 %v423, %v47
  %v428 = vand.u32 2147483647, %v424
  %v429 = vand.u32 2147483647, %v425
  %v430 = vand.u32 2147483647, %v426
  %v431 = vand.u32 2147483647, %v427
  %v432 = vmul.f32 %v428, 0.00390625
  %v433 = vmul.f32 %v429, 0.00390625
  %v434 = vmul.f32 %v430, 0.00390625
  %v435 = vmul.f32 %v431, 0.00390625
  %v436 = vmul.f32 %v412, %v432
  %v437 = vmul.f32 %v413, %v433
  %v438 = vmul.f32 %v414, %v434
  %v439 = vmul.f32 %v415, %v435
  %v440 = vadd.f32 %v400, %v436
  %v441 = vadd.f32 %v401, %v437
  %v442 = vadd.f32 %v402, %v438
  %v443 = vadd.f32 %v403, %v439
  %v444 = vmul.f32 %v404, 2.0
  %v445 = vmul.f32 %v405, 2.0
  %v446 = vmul.f32 %v406, 2.0
  %v447 = vmul.f32 %v407, 2.0
  %v448 = vmul.f32 %v408, 2.0
  %v449 = vmul.f32 %v409, 2.0
  %v450 = vmul.f32 %v410, 2.0
  %v451 = vmul.f32 %v411, 2.0
  %v452 = vtanh.pop %v448
  %v453 = vtanh.pop %v449
  %v454 = vtanh.pop %v450
  %v455 = vtanh.pop %v451
  %v456 = vfloor.f32 %v444
  %v457 = vfloor.f32 %v445
  %v458 = vfloor.f32 %v446
  %v459 = vfloor.f32 %v447
  %v460 = vsub.f32 %v444, %v456
  %v461 = vsub.f32 %v445, %v457
  %v462 = vsub.f32 %v446, %v458
  %v463 = vsub.f32 %v447, %v459
  %v464 = vsub.f32 %v460, %v44
  %v465 = vsub.f32 %v461, %v45
  %v466 = vsub.f32 %v462, %v46
  %v467 = vsub.f32 %v463, %v47
  %v468 = vand.u32 2147483647, %v464
  %v469 = vand.u32 2147483647, %v465
  %v470 = vand.u32 2147483647, %v466
  %v471 = vand.u32 2147483647, %v467
  %v472 = vmul.f32 %v468, 0.001953125
  %v473 = vmul.f32 %v469, 0.001953125
  %v474 = vmul.f32 %v470, 0.001953125
  %v475 = vmul.f32 %v471, 0.001953125
  %v476 = vmul.f32 %v452, %v472
  %v477 = vmul.f32 %v453, %v473
  %v478 = vmul.f32 %v454, %v474
  %v479 = vmul.f32 %v455, %v475
  %v480 = vadd.f32 %v440, %v476
  %v481 = vadd.f32 %v441, %v477
  %v482 = vadd.f32 %v442, %v478
  %v483 = vadd.f32 %v443, %v479
  %v484 = vmul.f32 %v444, 2.0
  %v485 = vmul.f32 %v445, 2.0
  %v486 = vmul.f32 %v446, 2.0
  %v487 = vmul.f32 %v447, 2.0
  %v488 = vmul.f32 %v448, 2.0
  %v489 = vmul.f32 %v449, 2.0
  %v490 = vmul.f32 %v450, 2.0
  %v491 = vmul.f32 %v451, 2.0
  %v492 = vtanh.pop %v488
  %v493 = vtanh.pop %v489
  %v494 = vtanh.pop %v490
  %v495 = vtanh.pop %v491
  %v496 = vfloor.f32 %v484
  %v497 = vfloor.f32 %v485
  %v498 = vfloor.f32 %v486
  %v499 = vfloor.f32 %v487
  %v500 = vsub.f32 %v484, %v496
  %v501 = vsub.f32 %v485, %v497
  %v502 = vsub.f32 %v486, %v498
  %v503 = vsub.f32 %v487, %v499
  %v504 = vsub.f32 %v500, %v44
  %v505 = vsub.f32 %v501, %v45
  %v506 = vsub.f32 %v502, %v46
  %v507 = vsub.f32 %v503, %v47
  %v508 = vand.u32 2147483647, %v504
  %v509 = vand.u32 2147483647, %v505
  %v510 = vand.u32 2147483647, %v506
  %v511 = vand.u32 2147483647, %v507
  %v512 = vmul.f32 %v508, 0.0009765625
  %v513 = vmul.f32 %v509, 0.0009765625
  %v514 = vmul.f32 %v510, 0.0009765625
  %v515 = vmul.f32 %v511, 0.0009765625
  %v516 = vmul.f32 %v492, %v512
  %v517 = vmul.f32 %v493, %v513
  %v518 = vmul.f32 %v494, %v514
  %v519 = vmul.f32 %v495, %v515
  %v520 = vadd.f32 %v480, %v516
  %v521 = vadd.f32 %v481, %v517
  %v522 = vadd.f32 %v482, %v518
  %v523 = vadd.f32 %v483, %v519
  %v524 = vmul.f32 %v484, 2.0
  %v525 = vmul.f32 %v485, 2.0
  %v526 = vmul.f32 %v486, 2.0
  %v527 = vmul.f32 %v487, 2.0
  %v528 = vmul.f32 %v488, 2.0
  %v529 = vmul.f32 %v489, 2.0
  %v530 = vmul.f32 %v490, 2.0
  %v531 = vmul.f32 %v491, 2.0
  %v532 = vtanh.pop %v528
  %v533 = vtanh.pop %v529
  %v534 = vtanh.pop %v530
  %v535 = vtanh.pop %v531
  %v536 = vfloor.f32 %v524
  %v537 = vfloor.f32 %v525
  %v538 = vfloor.f32 %v526
  %v539 = vfloor.f32 %v527
  %v540 = vsub.f32 %v524, %v536
  %v541 = vsub.f32 %v525, %v537
  %v542 = vsub.f32 %v526, %v538
  %v543 = vsub.f32 %v527, %v539
  %v544 = vsub.f32 %v540, %v44
  %v545 = vsub.f32 %v541, %v45
  %v546 = vsub.f32 %v542, %v46
  %v547 = vsub.f32 %v543, %v47
  %v548 = vand.u32 2147483647, %v544
  %v549 = vand.u32 2147483647, %v545
  %v550 = vand.u32 2147483647, %v546
  %v551 = vand.u32 2147483647, %v547
  %v552 = vmul.f32 %v548, 0.00048828125
  %v553 = vmul.f32 %v549, 0.00048828125
  %v554 = vmul.f32 %v550, 0.00048828125
  %v555 = vmul.f32 %v551, 0.00048828125
  %v556 = vmul.f32 %v532, %v552
  %v557 = vmul.f32 %v533, %v553
  %v558 = vmul.f32 %v534, %v554
  %v559 = vmul.f32 %v535, %v555
  %v560 = vadd.f32 %v520, %v556
  %v561 = vadd.f32 %v521, %v557
  %v562 = vadd.f32 %v522, %v558
  %v563 = vadd.f32 %v523, %v559
  %v564 = vmul.f32 %v524, 2.0
  %v565 = vmul.f32 %v525, 2.0
  %v566 = vmul.f32 %v526, 2.0
  %v567 = vmul.f32 %v527, 2.0
  %v568 = vmul.f32 %v528, 2.0
  %v569 = vmul.f32 %v529, 2.0
  %v570 = vmul.f32 %v530, 2.0
  %v571 = vmul.f32 %v531, 2.0
  %v572 = vtanh.pop %v568
  %v573 = vtanh.pop %v569
  %v574 = vtanh.pop %v570
  %v575 = vtanh.pop %v571
  %v576 = vfloor.f32 %v564
  %v577 = vfloor.f32 %v565
  %v578 = vfloor.f32 %v566
  %v579 = vfloor.f32 %v567
  %v580 = vsub.f32 %v564, %v576
  %v581 = vsub.f32 %v565, %v577
  %v582 = vsub.f32 %v566, %v578
  %v583 = vsub.f32 %v567, %v579
  %v584 = vsub.f32 %v580, %v44
  %v585 = vsub.f32 %v581, %v45
  %v586 = vsub.f32 %v582, %v46
  %v587 = vsub.f32 %v583, %v47
  %v588 = vand.u32 2147483647, %v584
  %v589 = vand.u32 2147483647, %v585
  %v590 = vand.u32 2147483647, %v586
  %v591 = vand.u32 2147483647, %v587
  %v592 = vmul.f32 %v588, 0.00024414063
  %v593 = vmul.f32 %v589, 0.00024414063
  %v594 = vmul.f32 %v590, 0.00024414063
  %v595 = vmul.f32 %v591, 0.00024414063
  %v596 = vmul.f32 %v572, %v592
  %v597 = vmul.f32 %v573, %v593
  %v598 = vmul.f32 %v574, %v594
  %v599 = vmul.f32 %v575, %v595
  %v600 = vadd.f32 %v560, %v596
  %v601 = vadd.f32 %v561, %v597
  %v602 = vadd.f32 %v562, %v598
  %v603 = vadd.f32 %v563, %v599
  %v604 = vmul.f32 %v564, 2.0
  %v605 = vmul.f32 %v565, 2.0
  %v606 = vmul.f32 %v566, 2.0
  %v607 = vmul.f32 %v567, 2.0
  %v608 = vmul.f32 %v568, 2.0
  %v609 = vmul.f32 %v569, 2.0
  %v610 = vmul.f32 %v570, 2.0
  %v611 = vmul.f32 %v571, 2.0
  %v612 = vtanh.pop %v608
  %v613 = vtanh.pop %v609
  %v614 = vtanh.pop %v610
  %v615 = vtanh.pop %v611
  %v616 = vfloor.f32 %v604
  %v617 = vfloor.f32 %v605
  %v618 = vfloor.f32 %v606
  %v619 = vfloor.f32 %v607
  %v620 = vsub.f32 %v604, %v616
  %v621 = vsub.f32 %v605, %v617
  %v622 = vsub.f32 %v606, %v618
  %v623 = vsub.f32 %v607, %v619
  %v624 = vsub.f32 %v620, %v44
  %v625 = vsub.f32 %v621, %v45
  %v626 = vsub.f32 %v622, %v46
  %v627 = vsub.f32 %v623, %v47
  %v628 = vand.u32 2147483647, %v624
  %v629 = vand.u32 2147483647, %v625
  %v630 = vand.u32 2147483647, %v626
  %v631 = vand.u32 2147483647, %v627
  %v632 = vmul.f32 %v628, 0.00012207031
  %v633 = vmul.f32 %v629, 0.00012207031
  %v634 = vmul.f32 %v630, 0.00012207031
  %v635 = vmul.f32 %v631, 0.00012207031
  %v636 = vmul.f32 %v612, %v632
  %v637 = vmul.f32 %v613, %v633
  %v638 = vmul.f32 %v614, %v634
  %v639 = vmul.f32 %v615, %v635
  %v640 = vadd.f32 %v600, %v636
  %v641 = vadd.f32 %v601, %v637
  %v642 = vadd.f32 %v602, %v638
  %v643 = vadd.f32 %v603, %v639
  %v644 = vmul.f32 %v604, 2.0
  %v645 = vmul.f32 %v605, 2.0
  %v646 = vmul.f32 %v606, 2.0
  %v647 = vmul.f32 %v607, 2.0
  %v648 = vmul.f32 %v608, 2.0
  %v649 = vmul.f32 %v609, 2.0
  %v650 = vmul.f32 %v610, 2.0
  %v651 = vmul.f32 %v611, 2.0
  %v652 = vtanh.pop %v648
  %v653 = vtanh.pop %v649
  %v654 = vtanh.pop %v650
  %v655 = vtanh.pop %v651
  %v656 = vfloor.f32 %v644
  %v657 = vfloor.f32 %v645
  %v658 = vfloor.f32 %v646
  %v659 = vfloor.f32 %v647
  %v660 = vsub.f32 %v644, %v656
  %v661 = vsub.f32 %v645, %v657
  %v662 = vsub.f32 %v646, %v658
  %v663 = vsub.f32 %v647, %v659
  %v664 = vsub.f32 %v660, %v44
  %v665 = vsub.f32 %v661, %v45
  %v666 = vsub.f32 %v662, %v46
  %v667 = vsub.f32 %v663, %v47
  %v668 = vand.u32 2147483647, %v664
  %v669 = vand.u32 2147483647, %v665
  %v670 = vand.u32 2147483647, %v666
  %v671 = vand.u32 2147483647, %v667
  %v672 = vmul.f32 %v668, 6.1035156e-05
  %v673 = vmul.f32 %v669, 6.1035156e-05
  %v674 = vmul.f32 %v670, 6.1035156e-05
  %v675 = vmul.f32 %v671, 6.1035156e-05
  %v676 = vmul.f32 %v652, %v672
  %v677 = vmul.f32 %v653, %v673
  %v678 = vmul.f32 %v654, %v674
  %v679 = vmul.f32 %v655, %v675
  %v680 = vadd.f32 %v640, %v676
  %v681 = vadd.f32 %v641, %v677
  %v682 = vadd.f32 %v642, %v678
  %v683 = vadd.f32 %v643, %v679
  %v684 = vmul.f32 %v644, 2.0
  %v685 = vmul.f32 %v645, 2.0
  %v686 = vmul.f32 %v646, 2.0
  %v687 = vmul.f32 %v647, 2.0
  %v688 = vmul.f32 %v648, 2.0
  %v689 = vmul.f32 %v649, 2.0
  %v690 = vmul.f32 %v650, 2.0
  %v691 = vmul.f32 %v651, 2.0
  %v692 = vtanh.pop %v688
  %v693 = vtanh.pop %v689
  %v694 = vtanh.pop %v690
  %v695 = vtanh.pop %v691
  %v696 = vfloor.f32 %v684
  %v697 = vfloor.f32 %v685
  %v698 = vfloor.f32 %v686
  %v699 = vfloor.f32 %v687
  %v700 = vsub.f32 %v684, %v696
  %v701 = vsub.f32 %v685, %v697
  %v702 = vsub.f32 %v686, %v698
  %v703 = vsub.f32 %v687, %v699
  %v704 = vsub.f32 %v700, %v44
  %v705 = vsub.f32 %v701, %v45
  %v706 = vsub.f32 %v702, %v46
  %v707 = vsub.f32 %v703, %v47
  %v708 = vand.u32 2147483647, %v704
  %v709 = vand.u32 2147483647, %v705
  %v710 = vand.u32 2147483647, %v706
  %v711 = vand.u32 2147483647, %v707
  %v712 = vmul.f32 %v708, 3.0517578e-05
  %v713 = vmul.f32 %v709, 3.0517578e-05
  %v714 = vmul.f32 %v710, 3.0517578e-05
  %v715 = vmul.f32 %v711, 3.0517578e-05
  %v716 = vmul.f32 %v692, %v712
  %v717 = vmul.f32 %v693, %v713
  %v718 = vmul.f32 %v694, %v714
  %v719 = vmul.f32 %v695, %v715
  %v720 = vadd.f32 %v680, %v716
  %v721 = vadd.f32 %v681, %v717
  %v722 = vadd.f32 %v682, %v718
  %v723 = vadd.f32 %v683, %v719
  %v724 = vmul.f32 %v684, 2.0
  %v725 = vmul.f32 %v685, 2.0
  %v726 = vmul.f32 %v686, 2.0
  %v727 = vmul.f32 %v687, 2.0
  %v728 = vmul.f32 %v688, 2.0
  %v729 = vmul.f32 %v689, 2.0
  %v730 = vmul.f32 %v690, 2.0
  %v731 = vmul.f32 %v691, 2.0
  %v732 = vtanh.pop %v728
  %v733 = vtanh.pop %v729
  %v734 = vtanh.pop %v730
  %v735 = vtanh.pop %v731
  %v736 = vfloor.f32 %v724
  %v737 = vfloor.f32 %v725
  %v738 = vfloor.f32 %v726
  %v739 = vfloor.f32 %v727
  %v740 = vsub.f32 %v724, %v736
  %v741 = vsub.f32 %v725, %v737
  %v742 = vsub.f32 %v726, %v738
  %v743 = vsub.f32 %v727, %v739
  %v744 = vsub.f32 %v740, %v44
  %v745 = vsub.f32 %v741, %v45
  %v746 = vsub.f32 %v742, %v46
  %v747 = vsub.f32 %v743, %v47
  %v748 = vand.u32 2147483647, %v744
  %v749 = vand.u32 2147483647, %v745
  %v750 = vand.u32 2147483647, %v746
  %v751 = vand.u32 2147483647, %v747
  %v752 = vmul.f32 %v748, 1.5258789e-05
  %v753 = vmul.f32 %v749, 1.5258789e-05
  %v754 = vmul.f32 %v750, 1.5258789e-05
  %v755 = vmul.f32 %v751, 1.5258789e-05
  %v756 = vmul.f32 %v732, %v752
  %v757 = vmul.f32 %v733, %v753
  %v758 = vmul.f32 %v734, %v754
  %v759 = vmul.f32 %v735, %v755
  %v760 = vadd.f32 %v720, %v756
  %v761 = vadd.f32 %v721, %v757
  %v762 = vadd.f32 %v722, %v758
  %v763 = vadd.f32 %v723, %v759
  %v764 = vmul.f32 %v724, 2.0
  %v765 = vmul.f32 %v725, 2.0
  %v766 = vmul.f32 %v726, 2.0
  %v767 = vmul.f32 %v727, 2.0
  %v768 = vmul.f32 %v728, 2.0
  %v769 = vmul.f32 %v729, 2.0
  %v770 = vmul.f32 %v730, 2.0
  %v771 = vmul.f32 %v731, 2.0
  %v772 = vtanh.pop %v768
  %v773 = vtanh.pop %v769
  %v774 = vtanh.pop %v770
  %v775 = vtanh.pop %v771
  %v776 = vfloor.f32 %v764
  %v777 = vfloor.f32 %v765
  %v778 = vfloor.f32 %v766
  %v779 = vfloor.f32 %v767
  %v780 = vsub.f32 %v764, %v776
  %v781 = vsub.f32 %v765, %v777
  %v782 = vsub.f32 %v766, %v778
  %v783 = vsub.f32 %v767, %v779
  %v784 = vsub.f32 %v780, %v44
  %v785 = vsub.f32 %v781, %v45
  %v786 = vsub.f32 %v782, %v46
  %v787 = vsub.f32 %v783, %v47
  %v788 = vand.u32 2147483647, %v784
  %v789 = vand.u32 2147483647, %v785
  %v790 = vand.u32 2147483647, %v786
  %v791 = vand.u32 2147483647, %v787
  %v792 = vmul.f32 %v788, 7.6293945e-06
  %v793 = vmul.f32 %v789, 7.6293945e-06
  %v794 = vmul.f32 %v790, 7.6293945e-06
  %v795 = vmul.f32 %v791, 7.6293945e-06
  %v796 = vmul.f32 %v772, %v792
  %v797 = vmul.f32 %v773, %v793
  %v798 = vmul.f32 %v774, %v794
  %v799 = vmul.f32 %v775, %v795
  %v800 = vadd.f32 %v760, %v796
  %v801 = vadd.f32 %v761, %v797
  %v802 = vadd.f32 %v762, %v798
  %v803 = vadd.f32 %v763, %v799
  %v804 = vmul.f32 %v764, 2.0
  %v805 = vmul.f32 %v765, 2.0
  %v806 = vmul.f32 %v766, 2.0
  %v807 = vmul.f32 %v767, 2.0
  %v808 = vmul.f32 %v768, 2.0
  %v809 = vmul.f32 %v769, 2.0
  %v810 = vmul.f32 %v770, 2.0
  %v811 = vmul.f32 %v771, 2.0
  %v812 = vtanh.pop %v808
  %v813 = vtanh.pop %v809
  %v814 = vtanh.pop %v810
  %v815 = vtanh.pop %v811
  %v816 = vfloor.f32 %v804
  %v817 = vfloor.f32 %v805
  %v818 = vfloor.f32 %v806
  %v819 = vfloor.f32 %v807
  %v820 = vsub.f32 %v804, %v816
  %v821 = vsub.f32 %v805, %v817
  %v822 = vsub.f32 %v806, %v818
  %v823 = vsub.f32 %v807, %v819
  %v824 = vsub.f32 %v820, %v44
  %v825 = vsub.f32 %v821, %v45
  %v826 = vsub.f32 %v822, %v46
  %v827 = vsub.f32 %v823, %v47
  %v828 = vand.u32 2147483647, %v824
  %v829 = vand.u32 2147483647, %v825
  %v830 = vand.u32 2147483647, %v826
  %v831 = vand.u32 2147483647, %v827
  %v832 = vmul.f32 %v828, 3.8146973e-06
  %v833 = vmul.f32 %v829, 3.8146973e-06
  %v834 = vmul.f32 %v830, 3.8146973e-06
  %v835 = vmul.f32 %v831, 3.8146973e-06
  %v836 = vmul.f32 %v812, %v832
  %v837 = vmul.f32 %v813, %v833
  %v838 = vmul.f32 %v814, %v834
  %v839 = vmul.f32 %v815, %v835
  %v840 = vadd.f32 %v800, %v836
  %v841 = vadd.f32 %v801, %v837
  %v842 = vadd.f32 %v802, %v838
  %v843 = vadd.f32 %v803, %v839
  %v844 = vmul.f32 %v804, 2.0
  %v845 = vmul.f32 %v805, 2.0
  %v846 = vmul.f32 %v806, 2.0
  %v847 = vmul.f32 %v807, 2.0
  %v848 = vmul.f32 %v808, 2.0
  %v849 = vmul.f32 %v809, 2.0
  %v850 = vmul.f32 %v810, 2.0
  %v851 = vmul.f32 %v811, 2.0
  %v852 = vtanh.pop %v848
  %v853 = vtanh.pop %v849
  %v854 = vtanh.pop %v850
  %v855 = vtanh.pop %v851
  %v856 = vfloor.f32 %v844
  %v857 = vfloor.f32 %v845
  %v858 = vfloor.f32 %v846
  %v859 = vfloor.f32 %v847
  %v860 = vsub.f32 %v844, %v856
  %v861 = vsub.f32 %v845, %v857
  %v862 = vsub.f32 %v846, %v858
  %v863 = vsub.f32 %v847, %v859
  %v864 = vsub.f32 %v860, %v44
  %v865 = vsub.f32 %v861, %v45
  %v866 = vsub.f32 %v862, %v46
  %v867 = vsub.f32 %v863, %v47
  %v868 = vand.u32 2147483647, %v864
  %v869 = vand.u32 2147483647, %v865
  %v870 = vand.u32 2147483647, %v866
  %v871 = vand.u32 2147483647, %v867
  %v872 = vmul.f32 %v868, 1.9073486e-06
  %v873 = vmul.f32 %v869, 1.9073486e-06
  %v874 = vmul.f32 %v870, 1.9073486e-06
  %v875 = vmul.f32 %v871, 1.9073486e-06
  %v876 = vmul.f32 %v852, %v872
  %v877 = vmul.f32 %v853, %v873
  %v878 = vmul.f32 %v854, %v874
  %v879 = vmul.f32 %v855, %v875
  %v880 = vadd.f32 %v840, %v876
  %v881 = vadd.f32 %v841, %v877
  %v882 = vadd.f32 %v842, %v878
  %v883 = vadd.f32 %v843, %v879
  %v884 = vmul.f32 %v844, 2.0
  %v885 = vmul.f32 %v845, 2.0
  %v886 = vmul.f32 %v846, 2.0
  %v887 = vmul.f32 %v847, 2.0
  %v888 = vmul.f32 %v848, 2.0
  %v889 = vmul.f32 %v849, 2.0
  %v890 = vmul.f32 %v850, 2.0
  %v891 = vmul.f32 %v851, 2.0
  %v892 = vtanh.pop %v888
  %v893 = vtanh.pop %v889
  %v894 = vtanh.pop %v890
  %v895 = vtanh.pop %v891
  %v896 = vfloor.f32 %v884
  %v897 = vfloor.f32 %v885
  %v898 = vfloor.f32 %v886
  %v899 = vfloor.f32 %v887
  %v900 = vsub.f32 %v884, %v896
  %v901 = vsub.f32 %v885, %v897
  %v902 = vsub.f32 %v886, %v898
  %v903 = vsub.f32 %v887, %v899
  %v904 = vsub.f32 %v900, %v44
  %v905 = vsub.f32 %v901, %v45
  %v906 = vsub.f32 %v902, %v46
  %v907 = vsub.f32 %v903, %v47
  %v908 = vand.u32 2147483647, %v904
  %v909 = vand.u32 2147483647, %v905
  %v910 = vand.u32 2147483647, %v906
  %v911 = vand.u32 2147483647, %v907
  %v912 = vmul.f32 %v908, 9.536743e-07
  %v913 = vmul.f32 %v909, 9.536743e-07
  %v914 = vmul.f32 %v910, 9.536743e-07
  %v915 = vmul.f32 %v911, 9.536743e-07
  %v916 = vmul.f32 %v892, %v912
  %v917 = vmul.f32 %v893, %v913
  %v918 = vmul.f32 %v894, %v914
  %v919 = vmul.f32 %v895, %v915
  %v920 = vadd.f32 %v880, %v916
  %v921 = vadd.f32 %v881, %v917
  %v922 = vadd.f32 %v882, %v918
  %v923 = vadd.f32 %v883, %v919
  %v924 = vmul.f32 %v884, 2.0
  %v925 = vmul.f32 %v885, 2.0
  %v926 = vmul.f32 %v886, 2.0
  %v927 = vmul.f32 %v887, 2.0
  %v928 = vmul.f32 %v888, 2.0
  %v929 = vmul.f32 %v889, 2.0
  %v930 = vmul.f32 %v890, 2.0
  %v931 = vmul.f32 %v891, 2.0
  %v932 = vtanh.pop %v928
  %v933 = vtanh.pop %v929
  %v934 = vtanh.pop %v930
  %v935 = vtanh.pop %v931
  %v936 = vfloor.f32 %v924
  %v937 = vfloor.f32 %v925
  %v938 = vfloor.f32 %v926
  %v939 = vfloor.f32 %v927
  %v940 = vsub.f32 %v924, %v936
  %v941 = vsub.f32 %v925, %v937
  %v942 = vsub.f32 %v926, %v938
  %v943 = vsub.f32 %v927, %v939
  %v944 = vsub.f32 %v940, %v44
  %v945 = vsub.f32 %v941, %v45
  %v946 = vsub.f32 %v942, %v46
  %v947 = vsub.f32 %v943, %v47
  %v948 = vand.u32 2147483647, %v944
  %v949 = vand.u32 2147483647, %v945
  %v950 = vand.u32 2147483647, %v946
  %v951 = vand.u32 2147483647, %v947
  %v952 = vmul.f32 %v948, 4.7683716e-07
  %v953 = vmul.f32 %v949, 4.7683716e-07
  %v954 = vmul.f32 %v950, 4.7683716e-07
  %v955 = vmul.f32 %v951, 4.7683716e-07
  %v956 = vmul.f32 %v932, %v952
  %v957 = vmul.f32 %v933, %v953
  %v958 = vmul.f32 %v934, %v954
  %v959 = vmul.f32 %v935, %v955
  %v960 = vadd.f32 %v920, %v956
  %v961 = vadd.f32 %v921, %v957
  %v962 = vadd.f32 %v922, %v958
  %v963 = vadd.f32 %v923, %v959
  %v964 = vmul.f32 %v924, 2.0
  %v965 = vmul.f32 %v925, 2.0
  %v966 = vmul.f32 %v926, 2.0
  %v967 = vmul.f32 %v927, 2.0
  %v968 = vmul.f32 %v928, 2.0
  %v969 = vmul.f32 %v929, 2.0
  %v970 = vmul.f32 %v930, 2.0
  %v971 = vmul.f32 %v931, 2.0
  %v972 = vtanh.pop %v968
  %v973 = vtanh.pop %v969
  %v974 = vtanh.pop %v970
  %v975 = vtanh.pop %v971
  %v976 = vfloor.f32 %v964
  %v977 = vfloor.f32 %v965
  %v978 = vfloor.f32 %v966
  %v979 = vfloor.f32 %v967
  %v980 = vsub.f32 %v964, %v976
  %v981 = vsub.f32 %v965, %v977
  %v982 = vsub.f32 %v966, %v978
  %v983 = vsub.f32 %v967, %v979
  %v984 = vsub.f32 %v980, %v44
  %v985 = vsub.f32 %v981, %v45
  %v986 = vsub.f32 %v982, %v46
  %v987 = vsub.f32 %v983, %v47
  %v988 = vand.u32 2147483647, %v984
  %v989 = vand.u32 2147483647, %v985
  %v990 = vand.u32 2147483647, %v986
  %v991 = vand.u32 2147483647, %v987
  %v992 = vmul.f32 %v988, 2.3841858e-07
  %v993 = vmul.f32 %v989, 2.3841858e-07
  %v994 = vmul.f32 %v990, 2.3841858e-07
  %v995 = vmul.f32 %v991, 2.3841858e-07
  %v996 = vmul.f32 %v972, %v992
  %v997 = vmul.f32 %v973, %v993
  %v998 = vmul.f32 %v974, %v994
  %v999 = vmul.f32 %v975, %v995
  %v1000 = vadd.f32 %v960, %v996
  %v1001 = vadd.f32 %v961, %v997
  %v1002 = vadd.f32 %v962, %v998
  %v1003 = vadd.f32 %v963, %v999
  %v1004 = vmul.f32 %v1000, 0.5
  %v1005 = vmul.f32 %v1001, 0.5
  %v1006 = vmul.f32 %v1002, 0.5
  %v1007 = vmul.f32 %v1003, 0.5
  %1008 = vst [vmem:[%s1] sm:$0xff] %v1004
  %1009 = vst [vmem:[%s1 + $0x8] sm:$0xff] %v1005
  %1010 = vst [vmem:[%s1 + $0x10] sm:$0xff] %v1006
  %1011 = vst [vmem:[%s1 + $0x18] sm:$0xff] %v1007
  // Predicated region
  $region6: #{modulated_blancmange.1} parent=0 // pred_check
    _
  $region7: #{modulated_blancmange.1} parent=0 // pred_check_branch
    %1013 = sbr.rel (0) target = $region9
  $region8: #{modulated_blancmange.1} parent=0 // pred_region
    _
  $region9: #{modulated_blancmange.1} parent=0 // pred_fallthru
    _
  // Predicated region
  $region10: #{modulated_blancmange.1} parent=0 // pred_check
    _
  $region11: #{modulated_blancmange.1} parent=0 // pred_check_branch
    %1015 = sbr.rel (0) target = $region13
  $region12: #{modulated_blancmange.1} parent=0 // pred_region
    _
  $region13: #{modulated_blancmange.1} parent=0 // pred_fallthru
    _

</llo_original>
